<compile_context>
chip_gen: v6e
topology: v6e:2x2x1
jax: 0.10.0
libtpu: 0.0.40
codegen_flags: <defaults>
</compile_context>

<pallas_src>
import functools

import jax
import jax.numpy as jnp
from jax import lax
from jax.experimental import pallas as pl
from jax.experimental.pallas import tpu as pltpu


def _round_up(x, m):
    return ((x + m - 1) // m) * m


def _mlp_kernel(x_ref, w1_ref, b1_ref, w2_ref, b2_ref, w3_ref, b3_ref, o_ref):
    # x_ref: (tb, n_in) -- batch on sublanes, exactly as stored in HBM.
    x = x_ref[...]

    # Layer 1: contract n_in of both operands -> (10, tb).  Batch lands on the
    # 128-wide lane axis, so every subsequent bias add / ReLU / store is
    # lane-dense.  Mosaic performs the layout flip of x internally (XLU slot).
    h1 = lax.dot_general(
        w1_ref[...], x,
        dimension_numbers=(((1,), (1,)), ((), ())),
        preferred_element_type=jnp.float32,
    )
    h1 = jnp.maximum(h1 + b1_ref[...], 0.0)

    h2 = jnp.dot(w2_ref[...], h1, preferred_element_type=jnp.float32)
    h2 = jnp.maximum(h2 + b2_ref[...], 0.0)

    h3 = jnp.dot(w3_ref[...], h2, preferred_element_type=jnp.float32) + b3_ref[...]
    o_ref[...] = h3.astype(o_ref.dtype)


@functools.partial(jax.jit, static_argnames=("tile_b",))
def neural_network_forward(x, params, *, tile_b=16384):
    """Forward pass matching NeuralNetwork.forward.

    x: (batch, n_input_vars) float32
    params: PyTorch-convention shapes:
        w1 (10, n_in), b1 (10,), w2 (5, 10), b2 (5,), w3 (n_out, 5), b3 (n_out,)
    """
    batch, n_in = x.shape
    n_out = params["w3"].shape[0]

    # Tile sizing.  The batch dimension sits on the lane axis of the output,
    # so a ragged tile must be a multiple of 128 (or equal the full batch).
    # Cap at ~half the batch so v7x's two TensorCores both get grid steps.
    tb = min(tile_b, _round_up(pl.cdiv(batch, 2), 128))
    if tb >= batch:
        tb = batch  # single full-extent block: no padding/masking at all
    grid = (pl.cdiv(batch, tb),)

    # Weights stay in PyTorch (out, in) layout; biases become column vectors
    # (out, 1) so they broadcast over the lane (batch) axis.
    w1, w2, w3 = params["w1"], params["w2"], params["w3"]
    b1 = params["b1"].reshape(-1, 1)
    b2 = params["b2"].reshape(-1, 1)
    b3 = params["b3"].reshape(-1, 1)

    # x / output blocks walk the batch axis; weights & biases are resident
    # (constant index_map -> no re-DMA across grid steps).
    x_spec = pl.BlockSpec((tb, n_in), lambda i: (i, 0))
    out_spec = pl.BlockSpec((n_out, tb), lambda i: (0, i))

    def const_spec(arr):
        return pl.BlockSpec(arr.shape, lambda i: (0, 0))

    flops = 2 * batch * (n_in * 10 + 10 * 5 + 5 * n_out)
    weight_bytes = 4 * (w1.size + w2.size + w3.size + b1.size + b2.size + b3.size)
    cost = pl.CostEstimate(
        flops=flops,
        transcendentals=0,
        bytes_accessed=4 * batch * (n_in + n_out) + weight_bytes,
    )

    out_t = pl.pallas_call(
        _mlp_kernel,
        out_shape=jax.ShapeDtypeStruct((n_out, batch), jnp.float32),
        grid=grid,
        in_specs=[
            x_spec,
            const_spec(w1), const_spec(b1),
            const_spec(w2), const_spec(b2),
            const_spec(w3), const_spec(b3),
        ],
        out_specs=out_spec,
        compiler_params=pltpu.CompilerParams(
            dimension_semantics=("parallel",),
            # Raises v5e's 16 MiB scoped default; well under every chip's
            # physical VMEM (128/128/64 MiB) at the default tile size.
            vmem_limit_bytes=48 * 1024 * 1024,
        ),
        cost_estimate=cost,
    )(x, w1, b1, w2, b2, w3, b3)

    # Back to PyTorch's (batch, n_out) layout.  For n_out == 1 this transpose
    # is effectively a reshape; flagged as a real (cheap) pass if n_out grows.
    return out_t.T


def init_params(key, n_input_vars, n_output_vars=1):
    """Deterministic init mimicking nn.Linear's uniform(-1/sqrt(fan_in), +1/sqrt(fan_in))."""
    ks = jax.random.split(key, 6)

    def linear(kw, kb, fan_in, fan_out):
        bound = 1.0 / jnp.sqrt(fan_in)
        w = jax.random.uniform(kw, (fan_out, fan_in), jnp.float32, -bound, bound)
        b = jax.random.uniform(kb, (fan_out,), jnp.float32, -bound, bound)
        return w, b

    w1, b1 = linear(ks[0], ks[1], n_input_vars, 10)
    w2, b2 = linear(ks[2], ks[3], 10, 5)
    w3, b3 = linear(ks[4], ks[5], 5, n_output_vars)
    return {"w1": w1, "b1": b1, "w2": w2, "b2": b2, "w3": w3, "b3": b3}


def _reference(x, params):
    h1 = jnp.maximum(x @ params["w1"].T + params["b1"], 0.0)
    h2 = jnp.maximum(h1 @ params["w2"].T + params["b2"], 0.0)
    return h2 @ params["w3"].T + params["b3"]


if __name__ == "__main__":
    key = jax.random.PRNGKey(0)
    k_x, k_p, k_x2 = jax.random.split(key, 3)

    n_input_vars = 13   # e.g. housing-style feature count
    n_output_vars = 1
    params = init_params(k_p, n_input_vars, n_output_vars)

    # Small batch -> single full-extent block (no masking path).
    batch = 8
    x = jax.random.normal(k_x, (batch, n_input_vars), dtype=jnp.float32)
    out = neural_network_forward(x, params)
    jax.block_until_ready(out)
    assert out.shape == (batch, n_output_vars)
    assert jnp.allclose(out, _reference(x, params), atol=1e-5, rtol=1e-5)

    # Larger batch, non-divisible by the tile: 4 grid steps with a ragged,
    # masked last block (1000 = 3*256 + 232).
    batch2 = 1000
    x2 = jax.random.normal(k_x2, (batch2, n_input_vars), dtype=jnp.float32)
    out2 = neural_network_forward(x2, params, tile_b=256)
    jax.block_until_ready(out2)
    assert out2.shape == (batch2, n_output_vars)
    assert jnp.allclose(out2, _reference(x2, params), atol=1e-4, rtol=1e-4)

    print("KERNEL_OK")
</pallas_src>

<mosaic_0001>
module attributes {stable_mosaic.version = 11 : i64} {
  func.func @_mlp_kernel(%arg0: i32, %arg1: memref<8x13xf32, #tpu.memory_space<vmem>>, %arg2: memref<10x13xf32, #tpu.memory_space<vmem>>, %arg3: memref<10x1xf32, #tpu.memory_space<vmem>>, %arg4: memref<5x10xf32, #tpu.memory_space<vmem>>, %arg5: memref<5x1xf32, #tpu.memory_space<vmem>>, %arg6: memref<1x5xf32, #tpu.memory_space<vmem>>, %arg7: memref<1x1xf32, #tpu.memory_space<vmem>>, %arg8: memref<1x8xf32, #tpu.memory_space<vmem>>) attributes {dimension_semantics = [#tpu.dimension_semantics<parallel>], iteration_bounds = array<i64: 1>, scalar_prefetch = 0 : i64, scratch_operands = 0 : i64, tpu.core_type = #tpu.core_type<tc>, window_params = [{transform_indices = @transform_0, window_bounds = array<i64: 8, 13>}, {pipeline_mode = #tpu.pipeline_mode<synchronous>, transform_indices = @transform_1, window_bounds = array<i64: 10, 13>}, {pipeline_mode = #tpu.pipeline_mode<synchronous>, transform_indices = @transform_2, window_bounds = array<i64: 10, 1>}, {pipeline_mode = #tpu.pipeline_mode<synchronous>, transform_indices = @transform_3, window_bounds = array<i64: 5, 10>}, {pipeline_mode = #tpu.pipeline_mode<synchronous>, transform_indices = @transform_4, window_bounds = array<i64: 5, 1>}, {pipeline_mode = #tpu.pipeline_mode<synchronous>, transform_indices = @transform_5, window_bounds = array<i64: 1, 5>}, {pipeline_mode = #tpu.pipeline_mode<synchronous>, transform_indices = @transform_6, window_bounds = array<i64: 1, 1>}, {transform_indices = @transform_7, window_bounds = array<i64: 1, 8>}]} {
    %c0 = arith.constant 0 : index
    %c0_0 = arith.constant 0 : index
    %0 = vector.load %arg1[%c0, %c0_0] : memref<8x13xf32, #tpu.memory_space<vmem>>, vector<8x13xf32>
    %c0_1 = arith.constant 0 : index
    %c0_2 = arith.constant 0 : index
    %1 = vector.load %arg2[%c0_1, %c0_2] : memref<10x13xf32, #tpu.memory_space<vmem>>, vector<10x13xf32>
    %cst = arith.constant dense<0.000000e+00> : vector<10x8xf32>
    %2 = tpu.matmul %1, %0, %cst {dimension_numbers = #tpu.dot_dimension_numbers<[1], [1], [0], [0], [0, 0, 1, 0], [], []>} : vector<10x13xf32>, vector<8x13xf32>, vector<10x8xf32> -> vector<10x8xf32>
    %c0_3 = arith.constant 0 : index
    %c0_4 = arith.constant 0 : index
    %3 = vector.load %arg3[%c0_3, %c0_4] : memref<10x1xf32, #tpu.memory_space<vmem>>, vector<10x1xf32>
    %4 = vector.broadcast %3 : vector<10x1xf32> to vector<10x8xf32>
    %5 = arith.addf %2, %4 : vector<10x8xf32>
    %cst_5 = arith.constant 0.000000e+00 : f32
    %6 = vector.broadcast %cst_5 : f32 to vector<10x8xf32>
    %7 = arith.maximumf %5, %6 : vector<10x8xf32>
    %c0_6 = arith.constant 0 : index
    %c0_7 = arith.constant 0 : index
    %8 = vector.load %arg4[%c0_6, %c0_7] : memref<5x10xf32, #tpu.memory_space<vmem>>, vector<5x10xf32>
    %cst_8 = arith.constant dense<0.000000e+00> : vector<5x8xf32>
    %9 = tpu.matmul %8, %7, %cst_8 {dimension_numbers = #tpu.dot_dimension_numbers<[1], [0], [0], [1], [0, 0, 1, 1], [], []>} : vector<5x10xf32>, vector<10x8xf32>, vector<5x8xf32> -> vector<5x8xf32>
    %c0_9 = arith.constant 0 : index
    %c0_10 = arith.constant 0 : index
    %10 = vector.load %arg5[%c0_9, %c0_10] : memref<5x1xf32, #tpu.memory_space<vmem>>, vector<5x1xf32>
    %11 = vector.broadcast %10 : vector<5x1xf32> to vector<5x8xf32>
    %12 = arith.addf %9, %11 : vector<5x8xf32>
    %cst_11 = arith.constant 0.000000e+00 : f32
    %13 = vector.broadcast %cst_11 : f32 to vector<5x8xf32>
    %14 = arith.maximumf %12, %13 : vector<5x8xf32>
    %c0_12 = arith.constant 0 : index
    %c0_13 = arith.constant 0 : index
    %15 = vector.load %arg6[%c0_12, %c0_13] : memref<1x5xf32, #tpu.memory_space<vmem>>, vector<1x5xf32>
    %cst_14 = arith.constant dense<0.000000e+00> : vector<1x8xf32>
    %16 = tpu.matmul %15, %14, %cst_14 {dimension_numbers = #tpu.dot_dimension_numbers<[1], [0], [0], [1], [0, 0, 1, 1], [], []>} : vector<1x5xf32>, vector<5x8xf32>, vector<1x8xf32> -> vector<1x8xf32>
    %c0_15 = arith.constant 0 : index
    %c0_16 = arith.constant 0 : index
    %17 = vector.load %arg7[%c0_15, %c0_16] : memref<1x1xf32, #tpu.memory_space<vmem>>, vector<1x1xf32>
    %18 = vector.broadcast %17 : vector<1x1xf32> to vector<1x8xf32>
    %19 = arith.addf %16, %18 : vector<1x8xf32>
    %c0_17 = arith.constant 0 : index
    %c0_18 = arith.constant 0 : index
    %20 = vector.load %arg8[%c0_17, %c0_18] : memref<1x8xf32, #tpu.memory_space<vmem>>, vector<1x8xf32>
    tpu.vector_store %arg8[%c0_17, %c0_18], %19 {strides = array<i32>} : memref<1x8xf32, #tpu.memory_space<vmem>>, vector<1x8xf32>,
    return
  }
  func.func @transform_0(%arg0: i32) -> (i32, i32) {
    %c0_i32 = arith.constant 0 : i32
    %c0_i32_0 = arith.constant 0 : i32
    return %arg0, %c0_i32 : i32, i32
  }
  func.func @transform_1(%arg0: i32) -> (i32, i32) {
    %c0_i32 = arith.constant 0 : i32
    %c0_i32_0 = arith.constant 0 : i32
    %c0_i32_1 = arith.constant 0 : i32
    return %c0_i32, %c0_i32_0 : i32, i32
  }
  func.func @transform_2(%arg0: i32) -> (i32, i32) {
    %c0_i32 = arith.constant 0 : i32
    %c0_i32_0 = arith.constant 0 : i32
    %c0_i32_1 = arith.constant 0 : i32
    return %c0_i32, %c0_i32_0 : i32, i32
  }
  func.func @transform_3(%arg0: i32) -> (i32, i32) {
    %c0_i32 = arith.constant 0 : i32
    %c0_i32_0 = arith.constant 0 : i32
    %c0_i32_1 = arith.constant 0 : i32
    return %c0_i32, %c0_i32_0 : i32, i32
  }
  func.func @transform_4(%arg0: i32) -> (i32, i32) {
    %c0_i32 = arith.constant 0 : i32
    %c0_i32_0 = arith.constant 0 : i32
    %c0_i32_1 = arith.constant 0 : i32
    return %c0_i32, %c0_i32_0 : i32, i32
  }
  func.func @transform_5(%arg0: i32) -> (i32, i32) {
    %c0_i32 = arith.constant 0 : i32
    %c0_i32_0 = arith.constant 0 : i32
    %c0_i32_1 = arith.constant 0 : i32
    return %c0_i32, %c0_i32_0 : i32, i32
  }
  func.func @transform_6(%arg0: i32) -> (i32, i32) {
    %c0_i32 = arith.constant 0 : i32
    %c0_i32_0 = arith.constant 0 : i32
    %c0_i32_1 = arith.constant 0 : i32
    return %c0_i32, %c0_i32_0 : i32, i32
  }
  func.func @transform_7(%arg0: i32) -> (i32, i32) {
    %c0_i32 = arith.constant 0 : i32
    %c0_i32_0 = arith.constant 0 : i32
    return %c0_i32, %arg0 : i32, i32
  }
}

</mosaic_0001>

<llo_original>
// kernel: neural_network_forward.1
$region0: #{neural_network_forward.1}
  #allocation0 [shape = 'u32[]', space=smem, size = 0x4, offset = 0x4, fixed_abs, tag = 'smem constant byte address 0x4 - core index']
  #allocation1 [shape = 'u32[144,128]{1,0:T(1,128)}', space=vmem, size = 0x12000, scoped, tag = 'internal scratch']
  #allocation2 [shape = 'f32[1,1]{1,0:T(1,128)S(1)}', space=vmem, size = 0x200, scoped, tag = 'scoped memory for neural_network_forward.1']
  %s0 = inlined_call_operand.vmem [shape: f32[8,13], index: 0, kind: input, shape index: {}]
  %s1 = inlined_call_operand.vmem [shape: f32[10,13], index: 1, kind: input, shape index: {}]
  %s2 = inlined_call_operand.vmem [shape: f32[10,1], index: 2, kind: input, shape index: {}]
  %s3 = inlined_call_operand.vmem [shape: f32[5,10], index: 3, kind: input, shape index: {}]
  %s4 = inlined_call_operand.vmem [shape: f32[5,1], index: 4, kind: input, shape index: {}]
  %s5 = inlined_call_operand.vmem [shape: f32[1,5], index: 5, kind: input, shape index: {}]
  %s6 = inlined_call_operand.<no memory space> [shape: f32[1,1], index: 6, kind: input, shape index: {}]
  %s7 = inlined_call_operand.hbm [shape: f32[1,8], index: 7, kind: output, shape index: {}]
  %s8 = sld [smem:[#allocation0]]
  $region38: #{neural_network_forward.1} parent=0
    _
  %s10 = ssub.s32 1, %s8
  %s11 = scalar_select 0, %s10, %s8
  %v12 = vstv %s6
  %13 = vst [vmem:[#allocation2] sm:$0x1] %v12
  $region1: #{neural_network_forward.1} parent=0
    #allocation3 [shape = 'u8[512]{0}', space=vmem, size = 0x400, scoped, tag = 'output window, operand 0, single buffered']
    #allocation4 [shape = 's32[1]{0}', space=sflag, size = 0x4, scoped, tag = 'scoped memory for neural_network_forward.1']
    %14 = vsyncpa [#allocation4], 0
    // Predicated region
    $region2: #{neural_network_forward.1} parent=1 // pred_check
      _
    $region3: #{neural_network_forward.1} parent=1 // pred_check_branch
      %16 = sbr.rel (0) target = $region5
    $region4: #{neural_network_forward.1} parent=1 // pred_region
      _
    $region5: #{neural_network_forward.1} parent=1 // pred_fallthru
      _
    // Predicated region
    $region6: #{neural_network_forward.1} parent=1 // pred_check
      _
    $region7: #{neural_network_forward.1} parent=1 // pred_check_branch
      %18 = sbr.rel (0) target = $region9
    $region8: #{neural_network_forward.1} parent=1 // pred_region
      _
    $region9: #{neural_network_forward.1} parent=1 // pred_fallthru
      _
    // Predicated region
    $region10: #{neural_network_forward.1} parent=1 // pred_check
      _
    $region11: #{neural_network_forward.1} parent=1 // pred_check_branch
      %20 = sbr.rel (0) target = $region13
    $region12: #{neural_network_forward.1} parent=1 // pred_region
      _
    $region13: #{neural_network_forward.1} parent=1 // pred_fallthru
      _
    // Predicated region
    $region14: #{neural_network_forward.1} parent=1 // pred_check
      _
    $region15: #{neural_network_forward.1} parent=1 // pred_check_branch
      %22 = sbr.rel (0) target = $region17
    $region16: #{neural_network_forward.1} parent=1 // pred_region
      _
    $region17: #{neural_network_forward.1} parent=1 // pred_fallthru
      _
    // Predicated region
    $region18: #{neural_network_forward.1} parent=1 // pred_check
      _
    $region19: #{neural_network_forward.1} parent=1 // pred_check_branch
      %24 = sbr.rel (0) target = $region21
    $region20: #{neural_network_forward.1} parent=1 // pred_region
      _
    $region21: #{neural_network_forward.1} parent=1 // pred_fallthru
      _
    // Predicated region
    $region22: #{neural_network_forward.1} parent=1 // pred_check
      _
    $region23: #{neural_network_forward.1} parent=1 // pred_check_branch
      %26 = sbr.rel (0) target = $region25
    $region24: #{neural_network_forward.1} parent=1 // pred_region
      _
    $region25: #{neural_network_forward.1} parent=1 // pred_fallthru
      _
    // Predicated region
    $region26: #{neural_network_forward.1} parent=1 // pred_check
      _
    $region27: #{neural_network_forward.1} parent=1 // pred_check_branch
      %28 = sbr.rel (0) target = $region29
    $region28: #{neural_network_forward.1} parent=1 // pred_region
      _
    $region29: #{neural_network_forward.1} parent=1 // pred_fallthru
      _
    %v29 = vld [vmem:[%s0] sm:$0xff]
    %v30 = vld [vmem:[%s1] sm:$0xff]
    %v31 = vld [vmem:[%s1 + $0x8] sm:$0x3]
    %v32 = vld [vmem:[%s2] sm:$0xff]
    %v33 = vld [vmem:[%s2 + $0x8] sm:$0x3]
    %35 = vset.pattern.permute.xlu0 0
    %36 = vperm.xlu0 %35, %v32
    %v37 = vpop.permute.xlu0 %36
    %40 = vset.pattern.permute.xlu0 0
    %41 = vperm.xlu0 %40, %v33
    %v42 = vpop.permute.xlu0 %41
    %vm44 = vcmask 105472
    %v46 = vsel %vm44, %v30, 0
    %v49 = vsel %vm44, %v31, 0
    %v52 = vsel %vm44, %v29, 0
    %54 = vmatprep.subr.mxu0 0.0
    %55 = vmatpush1.xpose.msra.mxu0 0.0
    %56 = vmatprep.subr.mxu0 0.0
    %57 = vmatpush1.xpose.msra.mxu0 0.0
    %58 = vmatprep.subr.mxu0 0.0
    %59 = vmatpush1.xpose.msra.mxu0 0.0
    %60 = vmatprep.subr.mxu0 0.0
    %61 = vmatpush1.xpose.msra.mxu0 0.0
    %62 = vmatprep.subr.mxu0 0.0
    %63 = vmatpush1.xpose.msra.mxu0 0.0
    %64 = vmatprep.subr.mxu0 0.0
    %65 = vmatpush1.xpose.msra.mxu0 0.0
    %66 = vmatprep.subr.mxu0 0.0
    %67 = vmatpush1.xpose.msra.mxu0 0.0
    %68 = vmatprep.subr.mxu0 0.0
    %69 = vmatpush1.xpose.msra.mxu0 0.0
    %70 = vmatprep.subr.mxu0 0.0
    %71 = vmatpush1.xpose.msra.mxu0 0.0
    %72 = vmatprep.subr.mxu0 0.0
    %73 = vmatpush1.xpose.msra.mxu0 0.0
    %74 = vmatprep.subr.mxu0 0.0
    %75 = vmatpush1.xpose.msra.mxu0 0.0
    %76 = vmatprep.subr.mxu0 0.0
    %77 = vmatpush1.xpose.msra.mxu0 0.0
    %78 = vmatprep.subr.mxu0 0.0
    %79 = vmatpush1.xpose.msra.mxu0 0.0
    %80 = vmatprep.subr.mxu0 0.0
    %81 = vmatpush1.xpose.msra.mxu0 0.0
    %82 = vmatprep.subr.mxu0 0.0
    %83 = vmatpush1.xpose.msra.mxu0 0.0
    %84 = vmatprep.subr.mxu0 0.0
    %85 = vmatpush1.xpose.msra.mxu0 %v52
    %86 = vmatprep.subr.mxu0 0.0
    %87 = vmatpush2.xpose.msra.mxu0 0.0
    %88 = vmatprep.subr.mxu0 0.0
    %89 = vmatpush2.xpose.msra.mxu0 0.0
    %90 = vmatprep.subr.mxu0 0.0
    %91 = vmatpush2.xpose.msra.mxu0 0.0
    %92 = vmatprep.subr.mxu0 0.0
    %93 = vmatpush2.xpose.msra.mxu0 0.0
    %94 = vmatprep.subr.mxu0 0.0
    %95 = vmatpush2.xpose.msra.mxu0 0.0
    %96 = vmatprep.subr.mxu0 0.0
    %97 = vmatpush2.xpose.msra.mxu0 0.0
    %98 = vmatprep.subr.mxu0 0.0
    %99 = vmatpush2.xpose.msra.mxu0 0.0
    %100 = vmatprep.subr.mxu0 0.0
    %101 = vmatpush2.xpose.msra.mxu0 0.0
    %102 = vmatprep.subr.mxu0 0.0
    %103 = vmatpush2.xpose.msra.mxu0 0.0
    %104 = vmatprep.subr.mxu0 0.0
    %105 = vmatpush2.xpose.msra.mxu0 0.0
    %106 = vmatprep.subr.mxu0 0.0
    %107 = vmatpush2.xpose.msra.mxu0 0.0
    %108 = vmatprep.subr.mxu0 0.0
    %109 = vmatpush2.xpose.msra.mxu0 0.0
    %110 = vmatprep.subr.mxu0 0.0
    %111 = vmatpush2.xpose.msra.mxu0 0.0
    %112 = vmatprep.subr.mxu0 0.0
    %113 = vmatpush2.xpose.msra.mxu0 0.0
    %114 = vmatprep.subr.mxu0 0.0
    %115 = vmatpush2.xpose.msra.mxu0 0.0
    %116 = vmatprep.subr.mxu0 0.0
    %117 = vmatpush2.xpose.msra.mxu0 0.0
    %118 = vmatprep.mubr.f32.mxu0 0.0
    %119 = vmatmul.mubr.f32.gmra.mxu0 %v46
    %v120 = vpop.f32.mrf.mxu0
    %v121 = vadd.f32 %v37, %v120
    %v122 = vpop.f32.mrf.mxu0
    %123 = vmatprep.mubr.f32.mxu0 0.0
    %124 = vmatmul.mubr.f32.gmra.mxu0 %v49
    %v125 = vpop.f32.mrf.mxu0
    %v126 = vadd.f32 %v42, %v125
    %v127 = vpop.f32.mrf.mxu0
    %128 = vdwg.mxu0
    %v129 = vmax.f32 %v121, 0.0
    %v130 = vmax.f32 %v126, 0.0
    %v131 = vld [vmem:[%s3] sm:$0x1f]
    %v132 = vld [vmem:[%s4] sm:$0x1f]
    %134 = vset.pattern.permute.xlu0 0
    %135 = vperm.xlu0 %134, %v132
    %v136 = vpop.permute.xlu0 %135
    %vm138 = vcmask 80896
    %v140 = vsel %vm138, %v131, 0
    %vm142 = vcmask 1041408
    %v144 = vsel %vm142, %v130, 0
    %146 = vmatprep.subr.mxu0 0.0
    %147 = vmatpush1.msra.mxu0 0.0
    %148 = vmatprep.subr.mxu0 0.0
    %149 = vmatpush1.msra.mxu0 0.0
    %150 = vmatprep.subr.mxu0 0.0
    %151 = vmatpush1.msra.mxu0 0.0
    %152 = vmatprep.subr.mxu0 0.0
    %153 = vmatpush1.msra.mxu0 0.0
    %154 = vmatprep.subr.mxu0 0.0
    %155 = vmatpush1.msra.mxu0 0.0
    %156 = vmatprep.subr.mxu0 0.0
    %157 = vmatpush1.msra.mxu0 0.0
    %158 = vmatprep.subr.mxu0 0.0
    %159 = vmatpush1.msra.mxu0 0.0
    %160 = vmatprep.subr.mxu0 0.0
    %161 = vmatpush1.msra.mxu0 0.0
    %162 = vmatprep.subr.mxu0 0.0
    %163 = vmatpush1.msra.mxu0 0.0
    %164 = vmatprep.subr.mxu0 0.0
    %165 = vmatpush1.msra.mxu0 0.0
    %166 = vmatprep.subr.mxu0 0.0
    %167 = vmatpush1.msra.mxu0 0.0
    %168 = vmatprep.subr.mxu0 0.0
    %169 = vmatpush1.msra.mxu0 0.0
    %170 = vmatprep.subr.mxu0 0.0
    %171 = vmatpush1.msra.mxu0 0.0
    %172 = vmatprep.subr.mxu0 0.0
    %173 = vmatpush1.msra.mxu0 0.0
    %174 = vmatprep.subr.mxu0 0.0
    %175 = vmatpush1.msra.mxu0 %v144
    %176 = vmatprep.subr.mxu0 0.0
    %177 = vmatpush1.msra.mxu0 %v129
    %178 = vmatprep.subr.mxu0 0.0
    %179 = vmatpush2.msra.mxu0 0.0
    %180 = vmatprep.subr.mxu0 0.0
    %181 = vmatpush2.msra.mxu0 0.0
    %182 = vmatprep.subr.mxu0 0.0
    %183 = vmatpush2.msra.mxu0 0.0
    %184 = vmatprep.subr.mxu0 0.0
    %185 = vmatpush2.msra.mxu0 0.0
    %186 = vmatprep.subr.mxu0 0.0
    %187 = vmatpush2.msra.mxu0 0.0
    %188 = vmatprep.subr.mxu0 0.0
    %189 = vmatpush2.msra.mxu0 0.0
    %190 = vmatprep.subr.mxu0 0.0
    %191 = vmatpush2.msra.mxu0 0.0
    %192 = vmatprep.subr.mxu0 0.0
    %193 = vmatpush2.msra.mxu0 0.0
    %194 = vmatprep.subr.mxu0 0.0
    %195 = vmatpush2.msra.mxu0 0.0
    %196 = vmatprep.subr.mxu0 0.0
    %197 = vmatpush2.msra.mxu0 0.0
    %198 = vmatprep.subr.mxu0 0.0
    %199 = vmatpush2.msra.mxu0 0.0
    %200 = vmatprep.subr.mxu0 0.0
    %201 = vmatpush2.msra.mxu0 0.0
    %202 = vmatprep.subr.mxu0 0.0
    %203 = vmatpush2.msra.mxu0 0.0
    %204 = vmatprep.subr.mxu0 0.0
    %205 = vmatpush2.msra.mxu0 0.0
    %206 = vmatprep.subr.mxu0 0.0
    %207 = vmatpush2.msra.mxu0 0.0
    %208 = vmatprep.subr.mxu0 0.0
    %209 = vmatpush2.msra.mxu0 0.0
    %210 = vmatprep.mubr.f32.mxu0 0.0
    %211 = vmatmul.mubr.f32.gmra.mxu0 %v140
    %v212 = vpop.f32.mrf.mxu0
    %v213 = vadd.f32 %v136, %v212
    %v214 = vpop.f32.mrf.mxu0
    %215 = vdwg.mxu0
    %v216 = vmax.f32 %v213, 0.0
    %v217 = vld [vmem:[%s5] sm:$0x1]
    %v218 = vld [vmem:[#allocation2] sm:$0x1]
    %220 = vset.pattern.permute.xlu0 0
    %221 = vperm.xlu0 %220, %v218
    %v222 = vpop.permute.xlu0 %221
    %v224 = vlaneseq
    %v225 = vshrl.u32 %v224, 7
    %v226 = vsub.s32 0, %v225
    %v227 = vrot.slane %v222, %v226
    %vm228 = vcmask 39936
    %v230 = vsel %vm228, %v217, 0
    %vm232 = vcmask 1044480
    %v234 = vsel %vm232, %v216, 0
    %236 = vmatprep.subr.mxu0 0.0
    %237 = vmatpush1.msra.mxu0 0.0
    %238 = vmatprep.subr.mxu0 0.0
    %239 = vmatpush1.msra.mxu0 0.0
    %240 = vmatprep.subr.mxu0 0.0
    %241 = vmatpush1.msra.mxu0 0.0
    %242 = vmatprep.subr.mxu0 0.0
    %243 = vmatpush1.msra.mxu0 0.0
    %244 = vmatprep.subr.mxu0 0.0
    %245 = vmatpush1.msra.mxu0 0.0
    %246 = vmatprep.subr.mxu0 0.0
    %247 = vmatpush1.msra.mxu0 0.0
    %248 = vmatprep.subr.mxu0 0.0
    %249 = vmatpush1.msra.mxu0 0.0
    %250 = vmatprep.subr.mxu0 0.0
    %251 = vmatpush1.msra.mxu0 0.0
    %252 = vmatprep.subr.mxu0 0.0
    %253 = vmatpush1.msra.mxu0 0.0
    %254 = vmatprep.subr.mxu0 0.0
    %255 = vmatpush1.msra.mxu0 0.0
    %256 = vmatprep.subr.mxu0 0.0
    %257 = vmatpush1.msra.mxu0 0.0
    %258 = vmatprep.subr.mxu0 0.0
    %259 = vmatpush1.msra.mxu0 0.0
    %260 = vmatprep.subr.mxu0 0.0
    %261 = vmatpush1.msra.mxu0 0.0
    %262 = vmatprep.subr.mxu0 0.0
    %263 = vmatpush1.msra.mxu0 0.0
    %264 = vmatprep.subr.mxu0 0.0
    %265 = vmatpush1.msra.mxu0 0.0
    %266 = vmatprep.subr.mxu0 0.0
    %267 = vmatpush1.msra.mxu0 %v234
    %268 = vmatprep.subr.mxu0 0.0
    %269 = vmatpush2.msra.mxu0 0.0
    %270 = vmatprep.subr.mxu0 0.0
    %271 = vmatpush2.msra.mxu0 0.0
    %272 = vmatprep.subr.mxu0 0.0
    %273 = vmatpush2.msra.mxu0 0.0
    %274 = vmatprep.subr.mxu0 0.0
    %275 = vmatpush2.msra.mxu0 0.0
    %276 = vmatprep.subr.mxu0 0.0
    %277 = vmatpush2.msra.mxu0 0.0
    %278 = vmatprep.subr.mxu0 0.0
    %279 = vmatpush2.msra.mxu0 0.0
    %280 = vmatprep.subr.mxu0 0.0
    %281 = vmatpush2.msra.mxu0 0.0
    %282 = vmatprep.subr.mxu0 0.0
    %283 = vmatpush2.msra.mxu0 0.0
    %284 = vmatprep.subr.mxu0 0.0
    %285 = vmatpush2.msra.mxu0 0.0
    %286 = vmatprep.subr.mxu0 0.0
    %287 = vmatpush2.msra.mxu0 0.0
    %288 = vmatprep.subr.mxu0 0.0
    %289 = vmatpush2.msra.mxu0 0.0
    %290 = vmatprep.subr.mxu0 0.0
    %291 = vmatpush2.msra.mxu0 0.0
    %292 = vmatprep.subr.mxu0 0.0
    %293 = vmatpush2.msra.mxu0 0.0
    %294 = vmatprep.subr.mxu0 0.0
    %295 = vmatpush2.msra.mxu0 0.0
    %296 = vmatprep.subr.mxu0 0.0
    %297 = vmatpush2.msra.mxu0 0.0
    %298 = vmatprep.subr.mxu0 0.0
    %299 = vmatpush2.msra.mxu0 0.0
    %300 = vmatprep.mubr.f32.mxu0 0.0
    %301 = vmatmul.mubr.f32.gmra.mxu0 %v230
    %v302 = vpop.f32.mrf.mxu0
    %v303 = vadd.f32 %v227, %v302
    %v304 = vpop.f32.mrf.mxu0
    %305 = vdwg.mxu0
    %vm306 = vcmask 57344
    %307 = vst.msk [vmem:[#allocation3] sm:$0x1] %vm306, %v303
    // Predicated region
    $region30: #{neural_network_forward.1} parent=1 // pred_check
      _
    $region31: #{neural_network_forward.1} parent=1 // pred_check_branch
      %309 = sbr.rel (0) target = $region33
    $region32: #{neural_network_forward.1} parent=1 // pred_region
      %s311 = ssub.s32 16, 16
      %312 = vsyncadd [#allocation4], %s311
      %s314 = sshll.u32 [#allocation3], 4
      %s315 = int_to_ptr.vmem [resolvable:$true] %s314
      %317 = dma.vmem_to_hbm [thread:$0]  %s315, 16, %s7, [#allocation4]
    $region33: #{neural_network_forward.1} parent=1 // pred_fallthru
      _
    // Predicated region
    $region34: #{neural_network_forward.1} parent=1 // pred_check
      _
    $region35: #{neural_network_forward.1} parent=1 // pred_check_branch
      %319 = sbr.rel (0) target = $region37
    $region36: #{neural_network_forward.1} parent=1 // pred_region
      %320 = dma.done [#allocation4], 16
    $region37: #{neural_network_forward.1} parent=1 // pred_fallthru
      _
    %321 = vsyncpa [#allocation4], 1

</llo_original>
